<compile_context>
chip_gen: v6e
topology: v6e:2x2x1
jax: 0.10.0
libtpu: 0.0.40
codegen_flags: <defaults>
</compile_context>

<pallas_src>
import jax
import jax.numpy as jnp
from jax.experimental import pallas as pl
from jax.experimental.pallas import tpu as pltpu


_LANE = 128                          # lane granularity (last dim)
_SUBLANE = 8                         # sublane granularity (second-to-last dim)
_W_TILE_TARGET_BYTES = 4 * 2**20     # 2-4 MiB streamed W tiles ~ HBM roofline
_SINGLE_BLOCK_BYTES = 4 * 2**20      # whole-problem-in-one-block threshold
_MAX_TK = 2048                       # full-K cutoff
_MAX_TM = 1024                       # large tm => W re-streamed fewer times


def _round_up(x, m):
    return ((x + m - 1) // m) * m


def _largest_divisor_tile(total, unit, cap):
    """Largest multiple of `unit` that divides `total` and is <= cap.

    `total` must itself be a multiple of `unit`.  Worst case returns `unit`.
    """
    cap = max(unit, min(cap, total))
    t = (cap // unit) * unit
    while t > unit:
        if total % t == 0:
            return t
        t -= unit
    return unit


# ----------------------------------------------------------------------------
# Kernels
# ----------------------------------------------------------------------------
def _matmul_kernel(z_ref, w_ref, o_ref):
    """Single K block (or single block overall): no accumulator, no branches."""
    o_ref[...] = jnp.dot(
        z_ref[...], w_ref[...], preferred_element_type=jnp.float32
    ).astype(o_ref.dtype)


def _matmul_acc_out_kernel(z_ref, w_ref, o_ref):
    """Multi-K fallback, f32 output: accumulate directly in the resident o_ref."""
    @pl.when(pl.program_id(2) == 0)
    def _():
        o_ref[...] = jnp.zeros_like(o_ref)

    o_ref[...] += jnp.dot(z_ref[...], w_ref[...], preferred_element_type=jnp.float32)


def _matmul_acc_scratch_kernel(z_ref, w_ref, o_ref, acc_ref):
    """Multi-K fallback, non-f32 output: f32 VMEM accumulator + final cast."""
    @pl.when(pl.program_id(2) == 0)
    def _():
        acc_ref[...] = jnp.zeros_like(acc_ref)

    acc_ref[...] += jnp.dot(z_ref[...], w_ref[...], preferred_element_type=jnp.float32)

    @pl.when(pl.program_id(2) == pl.num_programs(2) - 1)
    def _():
        o_ref[...] = acc_ref[...].astype(o_ref.dtype)


# ----------------------------------------------------------------------------
# Init-time weight preparation (hoisted out of the per-call path)
# ----------------------------------------------------------------------------
def prepare_decoder_weights(W, *, compute_dtype=None):
    """One-time weight layout fixup.

    W: (data_dim, z_dim), the nn.Linear weight (out_features, in_features).

    Returns (W_kn, data_dim, z_dim) where W_kn is:
      * cast to `compute_dtype` (e.g. bf16 halves streamed W HBM bytes; the
        kernel keeps an f32 accumulation and f32/bf16 output cast),
      * transposed to the MXU-native stationary layout (K, N) = (z_dim, data_dim),
      * zero-padded up to lane granularity (128) on K and N *only* when the
        weight is large enough that the kernel will have to tile K or N.
        Small weights stay unpadded and are consumed as full-dim blocks.
    """
    data_dim, z_dim = W.shape
    if compute_dtype is not None and W.dtype != jnp.dtype(compute_dtype):
        W = W.astype(compute_dtype)
    W_kn = W.T  # (z_dim, data_dim): MXU-native (K, N), no transposed contraction
    itemsize = jnp.dtype(W_kn.dtype).itemsize
    if z_dim * data_dim * itemsize > _W_TILE_TARGET_BYTES:
        kp = _round_up(z_dim, _LANE)
        np_ = _round_up(data_dim, _LANE)
        if (kp, np_) != (z_dim, data_dim):
            W_kn = jnp.pad(W_kn, ((0, kp - z_dim), (0, np_ - data_dim)))
    # TODO(synk): optional fp8 weight storage on v7x (W fp8, z bf16) for another
    # ~2x streamed-byte reduction in the memory-bound regime (v7x MXU: fp8, no int8).
    return W_kn, data_dim, z_dim


# ----------------------------------------------------------------------------
# Per-call forward
# ----------------------------------------------------------------------------
def decoder_forward(z, W_kn, data_dim, z_dim, *, out_dtype=None, force_tiled=False):
    """out = z @ W.T  with W_kn = prepare_decoder_weights(W)[0].

    z: (B, z_dim).  Returns (B, data_dim).
    """
    B, z_k = z.shape
    assert z_k == z_dim, (z_k, z_dim)
    Kp, Np = W_kn.shape
    assert Kp >= z_dim and Np >= data_dim

    if out_dtype is None:
        out_dtype = z.dtype
    if z.dtype != W_kn.dtype:
        z = z.astype(W_kn.dtype)  # match MXU operand dtypes (bf16 streaming path)

    w_item = jnp.dtype(W_kn.dtype).itemsize
    out_item = jnp.dtype(out_dtype).itemsize

    # ---------------------------------------------------------------- path A
    # Whole problem fits comfortably in VMEM as a single block: no grid, no
    # padding, block_shape == full array dims.
    total_bytes = (B * z_dim + Kp * Np) * w_item + B * data_dim * out_item
    if (not force_tiled and total_bytes <= _SINGLE_BLOCK_BYTES
            and (Kp, Np) == (z_dim, data_dim)):
        return pl.pallas_call(
            _matmul_kernel,
            out_shape=jax.ShapeDtypeStruct((B, data_dim), out_dtype),
        )(z, W_kn)

    # ---------------------------------------------------------------- path B
    # Tiled (M, N, K) grid, K-last.  W is already in (K, N) layout and, when it
    # needs tiling along K/N, already lane-padded at init time.
    Mp = _round_up(B, _SUBLANE)
    tm = Mp if Mp <= _MAX_TM else _largest_divisor_tile(Mp, _SUBLANE, _MAX_TM)

    aligned = (Kp % _LANE == 0) and (Np % _LANE == 0)
    if (not aligned) or Kp * Np * w_item <= _W_TILE_TARGET_BYTES:
        # W fits in one streamed tile (or is small & unpadded): full K and N.
        tk, tn = Kp, Np
    else:
        tk = Kp if Kp <= _MAX_TK else _largest_divisor_tile(Kp, _LANE, _MAX_TK)
        tn = _largest_divisor_tile(
            Np, _LANE, max(_LANE, _W_TILE_TARGET_BYTES // (tk * w_item)))

    gm, gn, gk = Mp // tm, Np // tn, Kp // tk

    # v7x megacore: guarantee >= 2 blocks along the "parallel" axes when the
    # problem is big enough to matter, so both TensorCores stream disjoint W.
    if gm * gn == 1 and Kp * Np * w_item >= (1 << 20):
        if Np % (2 * _LANE) == 0:
            tn = _largest_divisor_tile(Np, _LANE, Np // 2)
        elif Mp % (2 * _SUBLANE) == 0:
            tm = _largest_divisor_tile(Mp, _SUBLANE, Mp // 2)
        gm, gn = Mp // tm, Np // tn

    # Per-call padding touches only the (small) activation, never the weight.
    if (Mp, Kp) != (B, z_dim):
        z = jnp.pad(z, ((0, Mp - B), (0, Kp - z_dim)))

    if gk == 1:
        kernel, scratch = _matmul_kernel, []
    elif jnp.dtype(out_dtype) == jnp.dtype(jnp.float32):
        kernel, scratch = _matmul_acc_out_kernel, []   # accumulate in resident o_ref
    else:
        kernel, scratch = (_matmul_acc_scratch_kernel,
                           [pltpu.VMEM((tm, tn), jnp.float32)])

    # Advisory cost estimate (counts the W re-reads across the M grid axis).
    cost = pl.CostEstimate(
        flops=2 * Mp * Np * Kp,
        transcendentals=0,
        bytes_accessed=int(Mp * Kp * w_item + gm * Np * Kp * w_item
                           + Mp * Np * out_item),
    )

    # Scoped-VMEM limit derived per generation (v7x has 64 MiB per TC).
    working = 2 * (tm * tk + tk * tn) * w_item + 2 * tm * tn * out_item
    if scratch:
        working += tm * tn * 4
    try:
        vmem_cap = pltpu.get_tpu_info().vmem_capacity_bytes
    except Exception:
        vmem_cap = 64 * 2**20
    vmem_limit = int(min(vmem_cap * 3 // 4, max(8 * 2**20, 2 * working)))

    out_padded = pl.pallas_call(
        kernel,
        out_shape=jax.ShapeDtypeStruct((Mp, Np), out_dtype),
        grid_spec=pltpu.PrefetchScalarGridSpec(
            num_scalar_prefetch=0,
            grid=(gm, gn, gk),
            in_specs=[
                pl.BlockSpec((tm, tk), lambda i, j, k: (i, k)),   # z : (M, K)
                pl.BlockSpec((tk, tn), lambda i, j, k: (k, j)),   # W : (K, N)
            ],
            out_specs=pl.BlockSpec((tm, tn), lambda i, j, k: (i, j)),
            scratch_shapes=scratch,
        ),
        compiler_params=pltpu.CompilerParams(
            dimension_semantics=("parallel", "parallel", "arbitrary"),
            vmem_limit_bytes=vmem_limit,
        ),
        cost_estimate=cost,
    )(z, W_kn)

    if (Mp, Np) != (B, data_dim):
        out_padded = out_padded[:B, :data_dim]
    return out_padded


class Decoder:
    """Pallas counterpart of the PyTorch Decoder (bias-free Linear)."""

    def __init__(self, W, *, compute_dtype=None):
        self.W_kn, self.data_dim, self.z_dim = prepare_decoder_weights(
            W, compute_dtype=compute_dtype)

    def __call__(self, z, **kwargs):
        return decoder_forward(z, self.W_kn, self.data_dim, self.z_dim, **kwargs)


if __name__ == "__main__":
    # Small shapes consistent with the module: batch=8, z_dim=32, data_dim=64.
    B, z_dim, data_dim = 8, 32, 64

    key = jax.random.PRNGKey(0)
    k_w, k_z = jax.random.split(key)

    # Deterministic init mimicking nn.Linear's uniform(-1/sqrt(fan_in), +).
    bound = 1.0 / (z_dim ** 0.5)
    W = jax.random.uniform(k_w, (data_dim, z_dim), dtype=jnp.float32,
                           minval=-bound, maxval=bound)
    z = jax.random.normal(k_z, (B, z_dim), dtype=jnp.float32)

    ref = z @ W.T

    # 1) f32 path (single-block fast path; weights prepared once at init).
    W_kn, dd, zd = prepare_decoder_weights(W)
    out = decoder_forward(z, W_kn, dd, zd)
    out = jax.block_until_ready(out)
    assert out.shape == (B, data_dim)
    assert jnp.allclose(out, ref, atol=1e-5, rtol=1e-5)

    # 2) Same problem through the tiled grid path (exercises the BlockSpec /
    #    grid machinery used for large weights; full-dim blocks, no padding).
    out_tiled = decoder_forward(z, W_kn, dd, zd, force_tiled=True)
    out_tiled = jax.block_until_ready(out_tiled)
    assert jnp.allclose(out_tiled, ref, atol=1e-5, rtol=1e-5)

    # 3) bf16 weight-streaming path (halves W HBM bytes; f32 accumulate/output).
    W_kn_bf16, dd, zd = prepare_decoder_weights(W, compute_dtype=jnp.bfloat16)
    out_bf16 = decoder_forward(z, W_kn_bf16, dd, zd, out_dtype=jnp.float32)
    out_bf16 = jax.block_until_ready(out_bf16)
    assert jnp.allclose(out_bf16, ref, atol=5e-2, rtol=5e-2)

    print("KERNEL_OK")
</pallas_src>

<mosaic_0001>
module attributes {stable_mosaic.version = 11 : i64} {
  func.func @_matmul_kernel(%arg0: memref<8x32xf32, #tpu.memory_space<vmem>>, %arg1: memref<32x64xf32, #tpu.memory_space<vmem>>, %arg2: memref<8x64xf32, #tpu.memory_space<vmem>>) attributes {dimension_semantics = [], scalar_prefetch = 0 : i64, scratch_operands = 0 : i64, tpu.core_type = #tpu.core_type<tc>} {
    %c0 = arith.constant 0 : index
    %c0_0 = arith.constant 0 : index
    %0 = vector.load %arg0[%c0, %c0_0] : memref<8x32xf32, #tpu.memory_space<vmem>>, vector<8x32xf32>
    %c0_1 = arith.constant 0 : index
    %c0_2 = arith.constant 0 : index
    %1 = vector.load %arg1[%c0_1, %c0_2] : memref<32x64xf32, #tpu.memory_space<vmem>>, vector<32x64xf32>
    %cst = arith.constant dense<0.000000e+00> : vector<8x64xf32>
    %2 = tpu.matmul %0, %1, %cst {dimension_numbers = #tpu.dot_dimension_numbers<[1], [0], [0], [1], [0, 0, 1, 1], [], []>} : vector<8x32xf32>, vector<32x64xf32>, vector<8x64xf32> -> vector<8x64xf32>
    %c0_3 = arith.constant 0 : index
    %c0_4 = arith.constant 0 : index
    %3 = vector.load %arg2[%c0_3, %c0_4] : memref<8x64xf32, #tpu.memory_space<vmem>>, vector<8x64xf32>
    tpu.vector_store %arg2[%c0_3, %c0_4], %2 {strides = array<i32>} : memref<8x64xf32, #tpu.memory_space<vmem>>, vector<8x64xf32>,
    return
  }
}

</mosaic_0001>

<llo_original>
// kernel: tpu_custom_call.1
$region0: #{tpu_custom_call.1}
  #allocation0 [shape = 'u32[]', space=smem, size = 0x4, offset = 0x4, fixed_abs, tag = 'smem constant byte address 0x4 - core index']
  #allocation1 [shape = 'u32[144,128]{1,0:T(1,128)}', space=vmem, size = 0x12000, scoped, tag = 'internal scratch']
  %s0 = inlined_call_operand.hbm [shape: f32[8,32], index: 0, kind: input, shape index: {}]
  %s1 = inlined_call_operand.hbm [shape: f32[32,64], index: 1, kind: input, shape index: {}]
  %s2 = inlined_call_operand.hbm [shape: f32[8,64], index: 2, kind: output, shape index: {}]
  %s3 = sld [smem:[#allocation0]]
  $region26: #{tpu_custom_call.1} parent=0
    _
  %s5 = ssub.s32 1, %s3
  %s6 = scalar_select 0, %s5, %s3
  $region1: #{tpu_custom_call.1} parent=0
    #allocation2 [shape = 'u8[4096]{0}', space=vmem, size = 0x1000, scoped, tag = 'input window, operand 0, single buffered']
    #allocation3 [shape = 's32[1]{0}', space=sflag, size = 0x4, scoped, tag = 'scoped memory for tpu_custom_call.1']
    #allocation4 [shape = 's32[1]{0}', space=sflag, size = 0x4, scoped, tag = 'scoped memory for tpu_custom_call.1']
    #allocation5 [shape = 'u8[16384]{0}', space=vmem, size = 0x4000, scoped, tag = 'input window, operand 1, single buffered']
    #allocation6 [shape = 's32[1]{0}', space=sflag, size = 0x4, scoped, tag = 'scoped memory for tpu_custom_call.1']
    #allocation7 [shape = 'u8[4096]{0}', space=vmem, size = 0x1000, scoped, tag = 'output window, operand 0, single buffered']
    %7 = vsyncpa [#allocation3], 0
    %8 = vsyncpa [#allocation6], 0
    %9 = vsyncpa [#allocation4], 0
    // Predicated region
    $region2: #{tpu_custom_call.1} parent=1 // pred_check
      _
    $region3: #{tpu_custom_call.1} parent=1 // pred_check_branch
      %11 = sbr.rel (0) target = $region5
    $region4: #{tpu_custom_call.1} parent=1 // pred_region
      %s13 = ssub.s32 128, 128
      %14 = vsyncadd [#allocation3], %s13
      %s16 = sshll.u32 [#allocation2], 4
      %s17 = int_to_ptr.vmem [resolvable:$true] %s16
      %19 = dma.hbm_to_vmem [thread:$0]  %s0, 128, %s17, [#allocation3]
    $region5: #{tpu_custom_call.1} parent=1 // pred_fallthru
      _
    // Predicated region
    $region6: #{tpu_custom_call.1} parent=1 // pred_check
      _
    $region7: #{tpu_custom_call.1} parent=1 // pred_check_branch
      %21 = sbr.rel (0) target = $region9
    $region8: #{tpu_custom_call.1} parent=1 // pred_region
      %s23 = ssub.s32 512, 512
      %24 = vsyncadd [#allocation6], %s23
      %s25 = sshll.u32 [#allocation5], 4
      %s26 = int_to_ptr.vmem [resolvable:$true] %s25
      %31 = dma.hbm_to_vmem [thread:$0]  %s1, 512, %s26, [#allocation6], 128, 128, 8
    $region9: #{tpu_custom_call.1} parent=1 // pred_fallthru
      _
    // Predicated region
    $region10: #{tpu_custom_call.1} parent=1 // pred_check
      _
    $region11: #{tpu_custom_call.1} parent=1 // pred_check_branch
      %33 = sbr.rel (0) target = $region13
    $region12: #{tpu_custom_call.1} parent=1 // pred_region
      %34 = dma.done [#allocation3], 128
    $region13: #{tpu_custom_call.1} parent=1 // pred_fallthru
      _
    // Predicated region
    $region14: #{tpu_custom_call.1} parent=1 // pred_check
      _
    $region15: #{tpu_custom_call.1} parent=1 // pred_check_branch
      %36 = sbr.rel (0) target = $region17
    $region16: #{tpu_custom_call.1} parent=1 // pred_region
      %37 = dma.done [#allocation6], 512
    $region17: #{tpu_custom_call.1} parent=1 // pred_fallthru
      _
    %v38 = vld [vmem:[#allocation2] sm:$0xff]
    %v39 = vld [vmem:[#allocation5] sm:$0xff]
    %v40 = vld [vmem:[#allocation5 + $0x8] sm:$0xff]
    %v41 = vld [vmem:[#allocation5 + $0x10] sm:$0xff]
    %v42 = vld [vmem:[#allocation5 + $0x18] sm:$0xff]
    %vm43 = vcmask 261120
    %v45 = vsel %vm43, %v38, 0
    %47 = vmatprep.subr.mxu0 0.0
    %48 = vmatpush1.msra.mxu0 0.0
    %49 = vmatprep.subr.mxu0 0.0
    %50 = vmatpush1.msra.mxu0 0.0
    %51 = vmatprep.subr.mxu0 0.0
    %52 = vmatpush1.msra.mxu0 0.0
    %53 = vmatprep.subr.mxu0 0.0
    %54 = vmatpush1.msra.mxu0 0.0
    %55 = vmatprep.subr.mxu0 0.0
    %56 = vmatpush1.msra.mxu0 0.0
    %57 = vmatprep.subr.mxu0 0.0
    %58 = vmatpush1.msra.mxu0 0.0
    %59 = vmatprep.subr.mxu0 0.0
    %60 = vmatpush1.msra.mxu0 0.0
    %61 = vmatprep.subr.mxu0 0.0
    %62 = vmatpush1.msra.mxu0 0.0
    %63 = vmatprep.subr.mxu0 0.0
    %64 = vmatpush1.msra.mxu0 0.0
    %65 = vmatprep.subr.mxu0 0.0
    %66 = vmatpush1.msra.mxu0 0.0
    %67 = vmatprep.subr.mxu0 0.0
    %68 = vmatpush1.msra.mxu0 0.0
    %69 = vmatprep.subr.mxu0 0.0
    %70 = vmatpush1.msra.mxu0 0.0
    %71 = vmatprep.subr.mxu0 0.0
    %72 = vmatpush1.msra.mxu0 %v42
    %73 = vmatprep.subr.mxu0 0.0
    %74 = vmatpush1.msra.mxu0 %v41
    %75 = vmatprep.subr.mxu0 0.0
    %76 = vmatpush1.msra.mxu0 %v40
    %77 = vmatprep.subr.mxu0 0.0
    %78 = vmatpush1.msra.mxu0 %v39
    %79 = vmatprep.subr.mxu0 0.0
    %80 = vmatpush2.msra.mxu0 0.0
    %81 = vmatprep.subr.mxu0 0.0
    %82 = vmatpush2.msra.mxu0 0.0
    %83 = vmatprep.subr.mxu0 0.0
    %84 = vmatpush2.msra.mxu0 0.0
    %85 = vmatprep.subr.mxu0 0.0
    %86 = vmatpush2.msra.mxu0 0.0
    %87 = vmatprep.subr.mxu0 0.0
    %88 = vmatpush2.msra.mxu0 0.0
    %89 = vmatprep.subr.mxu0 0.0
    %90 = vmatpush2.msra.mxu0 0.0
    %91 = vmatprep.subr.mxu0 0.0
    %92 = vmatpush2.msra.mxu0 0.0
    %93 = vmatprep.subr.mxu0 0.0
    %94 = vmatpush2.msra.mxu0 0.0
    %95 = vmatprep.subr.mxu0 0.0
    %96 = vmatpush2.msra.mxu0 0.0
    %97 = vmatprep.subr.mxu0 0.0
    %98 = vmatpush2.msra.mxu0 0.0
    %99 = vmatprep.subr.mxu0 0.0
    %100 = vmatpush2.msra.mxu0 0.0
    %101 = vmatprep.subr.mxu0 0.0
    %102 = vmatpush2.msra.mxu0 0.0
    %103 = vmatprep.subr.mxu0 0.0
    %104 = vmatpush2.msra.mxu0 0.0
    %105 = vmatprep.subr.mxu0 0.0
    %106 = vmatpush2.msra.mxu0 0.0
    %107 = vmatprep.subr.mxu0 0.0
    %108 = vmatpush2.msra.mxu0 0.0
    %109 = vmatprep.subr.mxu0 0.0
    %110 = vmatpush2.msra.mxu0 0.0
    %111 = vmatprep.mubr.f32.mxu0 0.0
    %112 = vmatmul.mubr.f32.gmra.mxu0 %v45
    %v113 = vpop.f32.mrf.mxu0
    %v114 = vadd.f32 0.0, %v113
    %v115 = vpop.f32.mrf.mxu0
    %116 = vdwg.mxu0
    %vm117 = vcmask 523264
    %118 = vst.msk [vmem:[#allocation7] sm:$0xff] %vm117, %v114
    // Predicated region
    $region18: #{tpu_custom_call.1} parent=1 // pred_check
      _
    $region19: #{tpu_custom_call.1} parent=1 // pred_check_branch
      %120 = sbr.rel (0) target = $region21
    $region20: #{tpu_custom_call.1} parent=1 // pred_region
      %s122 = ssub.s32 128, 128
      %123 = vsyncadd [#allocation4], %s122
      %s125 = sshll.u32 [#allocation7], 4
      %s126 = int_to_ptr.vmem [resolvable:$true] %s125
      %128 = dma.vmem_to_hbm [thread:$0]  %s126, 128, %s2, [#allocation4]
    $region21: #{tpu_custom_call.1} parent=1 // pred_fallthru
      _
    // Predicated region
    $region22: #{tpu_custom_call.1} parent=1 // pred_check
      _
    $region23: #{tpu_custom_call.1} parent=1 // pred_check_branch
      %130 = sbr.rel (0) target = $region25
    $region24: #{tpu_custom_call.1} parent=1 // pred_region
      %131 = dma.done [#allocation4], 128
    $region25: #{tpu_custom_call.1} parent=1 // pred_fallthru
      _
    %132 = vsyncpa [#allocation3], 1
    %133 = vsyncpa [#allocation6], 1
    %134 = vsyncpa [#allocation4], 1

</llo_original>
